<compile_context>
chip_gen: v5e
topology: v5e:2x2
jax: 0.10.0
libtpu: 0.0.40
codegen_flags: <defaults>
</compile_context>

<pallas_src>
import jax
import jax.numpy as jnp
from jax.experimental import pallas as pl
from jax.experimental.pallas import tpu as pltpu

# Double-buffered activation-block budget (bytes). Chosen so the default
# (TB=8, TS=1024, D=768, bf16) block is 12 MiB per buffer / 24 MiB total,
# comfortably inside the 32 MiB scoped-VMEM default on v6e/v7x and well under
# v5e's 128 MiB physical VMEM once vmem_limit_bytes is raised explicitly.
_ACT_VMEM_BUDGET = 24 * 1024 * 1024


def _pooled_head(s, p, o_ref):
    # s: [TB, D] f32 un-normalized sequence sum; p: [4, D] packed params
    #    (row 0 = BN scale, 1 = BN shift, 2 = fc weight, 3[,0] = fc bias).
    # F.normalize(mean, dim=-1, eps=1e-12) is scale-invariant in s, so the
    # mean's 1/S is dropped (the eps clamp effectively becomes S*1e-12).
    ssq = jnp.sum(s * s, axis=-1, keepdims=True)
    m = s * jax.lax.rsqrt(jnp.maximum(ssq, 1e-24))
    scale = p[0:1, :]
    shift = p[1:2, :]
    w = p[2:3, :]
    bias = p[3:4, 0:1]
    # BatchNorm1d (eval) folded into one FMA, then ReLU.
    # Dropout(0.5) is identity in eval mode.
    y = jnp.maximum(m * scale + shift, 0.0)
    out = jnp.sum(y * w, axis=-1, keepdims=True) + bias
    o_ref[...] = out.astype(o_ref.dtype)


def _head_kernel_single(h_ref, p_ref, o_ref):
    # h_ref: [TB, S, D] activations, whole sequence resident.
    s = jnp.sum(h_ref[...].astype(jnp.float32), axis=1)
    _pooled_head(s, p_ref[...], o_ref)


def _head_kernel_acc(h_ref, p_ref, o_ref, acc_ref):
    # h_ref: [TB, TS, D] activation block; acc_ref: [TB, D] f32 running sum.
    k = pl.program_id(1)

    @pl.when(k == 0)
    def _():
        acc_ref[...] = jnp.zeros_like(acc_ref)

    acc_ref[...] += jnp.sum(h_ref[...].astype(jnp.float32), axis=1)

    @pl.when(k == pl.num_programs(1) - 1)
    def _():
        _pooled_head(acc_ref[...], p_ref[...], o_ref)


def _pick_batch_tile(B, cap):
    """Largest multiple-of-8 divisor of B <= cap, preferring >= 2 grid steps
    over batch so v7x can shard the 'parallel' axis across its 2 TCs."""
    if B <= 8:
        return B
    two_step_cap = (min(cap, B // 2) // 8) * 8
    for t in range(two_step_cap, 7, -8):
        if B % t == 0:
            return t
    one_step_cap = (min(cap, B) // 8) * 8
    for t in range(one_step_cap, 7, -8):
        if B % t == 0:
            return t
    return B  # full batch: (B, 1) output block equals the full array dims


def _pick_seq_tile(S, cap, tb, d, itemsize, act_budget):
    """Whole S (single pass) if it fits the double-buffered activation budget
    and the user cap; otherwise the largest multiple-of-8 divisor within both."""
    ts_budget = max(8, act_budget // (2 * tb * d * itemsize))
    if S <= cap and S <= ts_budget:
        return S
    lim = max(8, (min(cap, ts_budget) // 8) * 8)
    for t in range(lim, 7, -8):
        if S % t == 0:
            return t
    # No tileable divisor: fall back to the full sequence. vmem_limit_bytes is
    # derived from the actual choice, so an oversize block fails loudly at
    # compile time instead of silently overflowing scoped VMEM.
    return S


def desirable_head(hidden_out, gamma, beta, running_mean, running_var,
                   fc_weight, fc_bias, *, batch_tile=8, seq_tile=1024,
                   act_vmem_budget=_ACT_VMEM_BUDGET):
    """hidden_out: [B, S, D] (bf16 or f32, used as-is); gamma/beta/running_*
    and fc_weight are per-feature [1, D]; fc_bias is [1, 1]. Returns [B, 1] f32.
    """
    B, S, D = hidden_out.shape
    itemsize = jnp.dtype(hidden_out.dtype).itemsize

    # Fold BatchNorm1d (eval) into scale/shift, then pack scale, shift, the
    # Linear weight and the Linear bias into a single (4, D) f32 operand:
    # one BlockSpec / one DMA / one (8, D)-padded VMEM slab.
    inv_std = jax.lax.rsqrt(running_var.astype(jnp.float32) + 1e-5)
    scale = gamma.astype(jnp.float32) * inv_std
    shift = beta.astype(jnp.float32) - running_mean.astype(jnp.float32) * scale
    w_row = fc_weight.astype(jnp.float32).reshape(1, D)
    bias_row = jnp.zeros((1, D), jnp.float32).at[0, 0].set(
        fc_bias.astype(jnp.float32)[0, 0])
    params = jnp.concatenate(
        [scale.reshape(1, D), shift.reshape(1, D), w_row, bias_row], axis=0)

    TB = _pick_batch_tile(B, batch_tile)
    TS = _pick_seq_tile(S, seq_tile, TB, D, itemsize, act_vmem_budget)
    single_pass = (TS == S)

    # VMEM accounting for the explicit scoped limit (double-buffered blocks;
    # (4, D) params pad to (8, D); output pads to at least (8, 128)).
    act_bytes = 2 * TB * TS * D * itemsize
    param_bytes = 2 * 8 * D * 4
    out_bytes = 2 * max(TB, 8) * 128 * 4
    scratch_bytes = 0 if single_pass else TB * D * 4
    vmem_limit = max(32 << 20,
                     int((act_bytes + param_bytes + out_bytes + scratch_bytes)
                         * 1.2))

    cost = pl.CostEstimate(
        flops=B * S * D + 8 * B * D,
        transcendentals=B,
        bytes_accessed=B * S * D * itemsize + 4 * D * 4 + B * 4,
    )
    out_shape = jax.ShapeDtypeStruct((B, 1), jnp.float32)

    if single_pass:
        return pl.pallas_call(
            _head_kernel_single,
            out_shape=out_shape,
            grid_spec=pltpu.PrefetchScalarGridSpec(
                num_scalar_prefetch=0,
                grid=(B // TB,),
                in_specs=[
                    pl.BlockSpec((TB, S, D), lambda i: (i, 0, 0)),
                    pl.BlockSpec((4, D), lambda i: (0, 0)),
                ],
                out_specs=pl.BlockSpec((TB, 1), lambda i: (i, 0)),
            ),
            compiler_params=pltpu.CompilerParams(
                dimension_semantics=("parallel",),
                vmem_limit_bytes=vmem_limit),
            cost_estimate=cost,
        )(hidden_out, params)

    return pl.pallas_call(
        _head_kernel_acc,
        out_shape=out_shape,
        grid_spec=pltpu.PrefetchScalarGridSpec(
            num_scalar_prefetch=0,
            grid=(B // TB, S // TS),
            in_specs=[
                pl.BlockSpec((TB, TS, D), lambda i, k: (i, k, 0)),
                pl.BlockSpec((4, D), lambda i, k: (0, 0)),
            ],
            out_specs=pl.BlockSpec((TB, 1), lambda i, k: (i, 0)),
            scratch_shapes=[pltpu.VMEM((TB, D), jnp.float32)],
        ),
        compiler_params=pltpu.CompilerParams(
            dimension_semantics=("parallel", "arbitrary"),
            vmem_limit_bytes=vmem_limit),
        cost_estimate=cost,
    )(hidden_out, params)


def reference_head(hidden_out, gamma, beta, running_mean, running_var,
                   fc_weight, fc_bias):
    # Pure-JAX reference following the PyTorch op order exactly.
    m = jnp.mean(hidden_out, axis=1)
    norm = jnp.sqrt(jnp.sum(m * m, axis=-1, keepdims=True))
    m = m / jnp.maximum(norm, 1e-12)
    xhat = (m - running_mean) / jnp.sqrt(running_var + 1e-5)
    y = jnp.maximum(xhat * gamma + beta, 0.0)
    return jnp.sum(y * fc_weight, axis=-1, keepdims=True) + fc_bias[0, 0]


if __name__ == "__main__":
    # 'xlm-roberta-base' family => embedding_dim = 768. Small B, S for the test.
    B, S, D = 2, 8, 768

    key = jax.random.PRNGKey(0)
    k_h, k_g, k_b, k_rm, k_rv, k_w, k_bias, k_h2 = jax.random.split(key, 8)

    # Stand-in for model(...).hidden_states[-1]; bf16 end-to-end as the
    # backbone would hand over (kernel accumulates in f32).
    hidden_out = jax.random.normal(k_h, (B, S, D),
                                   dtype=jnp.float32).astype(jnp.bfloat16)

    gamma = 1.0 + 0.1 * jax.random.normal(k_g, (1, D), dtype=jnp.float32)
    beta = 0.1 * jax.random.normal(k_b, (1, D), dtype=jnp.float32)
    running_mean = 0.05 * jax.random.normal(k_rm, (1, D), dtype=jnp.float32)
    running_var = 1.0 + 0.1 * jax.nn.softplus(
        jax.random.normal(k_rv, (1, D), dtype=jnp.float32))
    fc_weight = jax.random.normal(k_w, (1, D), dtype=jnp.float32) / jnp.sqrt(D)
    fc_bias = 0.01 * jax.random.normal(k_bias, (1, 1), dtype=jnp.float32)

    # Path 1: single-pass (whole sequence resident, 1-D grid over batch).
    out = desirable_head(hidden_out, gamma, beta, running_mean, running_var,
                         fc_weight, fc_bias)
    out = jax.block_until_ready(out)
    ref = reference_head(hidden_out.astype(jnp.float32), gamma, beta,
                         running_mean, running_var, fc_weight, fc_bias)
    assert out.shape == (B, 1)
    assert jnp.allclose(out, ref, atol=2e-4, rtol=2e-4), (out, ref)

    # Path 2: accumulating multi-seq-block path (forced via a small seq_tile).
    B2, S2 = 8, 32
    hidden_out2 = jax.random.normal(k_h2, (B2, S2, D),
                                    dtype=jnp.float32).astype(jnp.bfloat16)
    out2 = desirable_head(hidden_out2, gamma, beta, running_mean, running_var,
                          fc_weight, fc_bias, seq_tile=8)
    out2 = jax.block_until_ready(out2)
    ref2 = reference_head(hidden_out2.astype(jnp.float32), gamma, beta,
                          running_mean, running_var, fc_weight, fc_bias)
    assert out2.shape == (B2, 1)
    assert jnp.allclose(out2, ref2, atol=2e-4, rtol=2e-4), (out2, ref2)

    print("KERNEL_OK")
</pallas_src>

<mosaic_0001>
module attributes {stable_mosaic.version = 11 : i64} {
  func.func @_head_kernel_single(%arg0: i32, %arg1: memref<2x8x768xbf16, #tpu.memory_space<vmem>>, %arg2: memref<4x768xf32, #tpu.memory_space<vmem>>, %arg3: memref<2x1xf32, #tpu.memory_space<vmem>>) attributes {dimension_semantics = [#tpu.dimension_semantics<parallel>], iteration_bounds = array<i64: 1>, scalar_prefetch = 0 : i64, scratch_operands = 0 : i64, tpu.core_type = #tpu.core_type<tc>, window_params = [{transform_indices = @transform_0, window_bounds = array<i64: 2, 8, 768>}, {pipeline_mode = #tpu.pipeline_mode<synchronous>, transform_indices = @transform_1, window_bounds = array<i64: 4, 768>}, {transform_indices = @transform_2, window_bounds = array<i64: 2, 1>}]} {
    %c0 = arith.constant 0 : index
    %c0_0 = arith.constant 0 : index
    %c0_1 = arith.constant 0 : index
    %0 = vector.load %arg1[%c0, %c0_0, %c0_1] : memref<2x8x768xbf16, #tpu.memory_space<vmem>>, vector<2x8x768xbf16>
    %1 = arith.extf %0 : vector<2x8x768xbf16> to vector<2x8x768xf32>
    %cst = arith.constant dense<0.000000e+00> : vector<2x768xf32>
    %2 = vector.multi_reduction <add>, %1, %cst [1] : vector<2x8x768xf32> to vector<2x768xf32>
    %c0_2 = arith.constant 0 : index
    %c0_3 = arith.constant 0 : index
    %3 = vector.load %arg2[%c0_2, %c0_3] : memref<4x768xf32, #tpu.memory_space<vmem>>, vector<4x768xf32>
    %4 = arith.mulf %2, %2 : vector<2x768xf32>
    %cst_4 = arith.constant dense<0.000000e+00> : vector<2xf32>
    %5 = vector.multi_reduction <add>, %4, %cst_4 [1] : vector<2x768xf32> to vector<2xf32>
    %6 = vector.shape_cast %5 : vector<2xf32> to vector<2x1xf32>
    %cst_5 = arith.constant 1.000000e-24 : f32
    %7 = vector.broadcast %cst_5 : f32 to vector<2x1xf32>
    %8 = arith.maximumf %6, %7 : vector<2x1xf32>
    %9 = math.rsqrt %8 : vector<2x1xf32>
    %10 = vector.broadcast %9 : vector<2x1xf32> to vector<2x768xf32>
    %11 = arith.mulf %2, %10 : vector<2x768xf32>
    %12 = vector.extract_strided_slice %3 {offsets = [0, 0], sizes = [1, 768], strides = [1, 1]} : vector<4x768xf32> to vector<1x768xf32>
    %13 = vector.extract_strided_slice %3 {offsets = [1, 0], sizes = [1, 768], strides = [1, 1]} : vector<4x768xf32> to vector<1x768xf32>
    %14 = vector.extract_strided_slice %3 {offsets = [2, 0], sizes = [1, 768], strides = [1, 1]} : vector<4x768xf32> to vector<1x768xf32>
    %15 = vector.extract_strided_slice %3 {offsets = [3, 0], sizes = [1, 1], strides = [1, 1]} : vector<4x768xf32> to vector<1x1xf32>
    %16 = vector.broadcast %12 : vector<1x768xf32> to vector<2x768xf32>
    %17 = arith.mulf %11, %16 : vector<2x768xf32>
    %18 = vector.broadcast %13 : vector<1x768xf32> to vector<2x768xf32>
    %19 = arith.addf %17, %18 : vector<2x768xf32>
    %cst_6 = arith.constant 0.000000e+00 : f32
    %20 = vector.broadcast %cst_6 : f32 to vector<2x768xf32>
    %21 = arith.maximumf %19, %20 : vector<2x768xf32>
    %22 = vector.broadcast %14 : vector<1x768xf32> to vector<2x768xf32>
    %23 = arith.mulf %21, %22 : vector<2x768xf32>
    %cst_7 = arith.constant dense<0.000000e+00> : vector<2xf32>
    %24 = vector.multi_reduction <add>, %23, %cst_7 [1] : vector<2x768xf32> to vector<2xf32>
    %25 = vector.shape_cast %24 : vector<2xf32> to vector<2x1xf32>
    %26 = vector.broadcast %15 : vector<1x1xf32> to vector<2x1xf32>
    %27 = arith.addf %25, %26 : vector<2x1xf32>
    %c0_8 = arith.constant 0 : index
    %c0_9 = arith.constant 0 : index
    %28 = vector.load %arg3[%c0_8, %c0_9] : memref<2x1xf32, #tpu.memory_space<vmem>>, vector<2x1xf32>
    tpu.vector_store %arg3[%c0_8, %c0_9], %27 {strides = array<i32>} : memref<2x1xf32, #tpu.memory_space<vmem>>, vector<2x1xf32>,
    return
  }
  func.func @transform_0(%arg0: i32) -> (i32, i32, i32) {
    %c0_i32 = arith.constant 0 : i32
    %c0_i32_0 = arith.constant 0 : i32
    %c0_i32_1 = arith.constant 0 : i32
    return %arg0, %c0_i32, %c0_i32_0 : i32, i32, i32
  }
  func.func @transform_1(%arg0: i32) -> (i32, i32) {
    %c0_i32 = arith.constant 0 : i32
    %c0_i32_0 = arith.constant 0 : i32
    %c0_i32_1 = arith.constant 0 : i32
    return %c0_i32, %c0_i32_0 : i32, i32
  }
  func.func @transform_2(%arg0: i32) -> (i32, i32) {
    %c0_i32 = arith.constant 0 : i32
    %c0_i32_0 = arith.constant 0 : i32
    return %arg0, %c0_i32 : i32, i32
  }
}

</mosaic_0001>

<llo_original>
// kernel: tpu_custom_call.1
$region0: #{tpu_custom_call.1}
  #allocation0 [shape = 'u32[]', space=smem, size = 0x4, offset = 0x4, fixed_abs, tag = 'smem constant byte address 0x4 - core index']
  #allocation1 [shape = 'u32[72,128]{1,0:T(1,128)}', space=vmem, size = 0x9000, scoped, tag = 'internal scratch']
  %s0 = inlined_call_operand.hbm [shape: bf16[2,8,768], index: 0, kind: input, shape index: {}]
  %s1 = inlined_call_operand.hbm [shape: f32[4,768], index: 1, kind: input, shape index: {}]
  %s2 = inlined_call_operand.vmem [shape: f32[2,1], index: 2, kind: output, shape index: {}]
  %s3 = sld [smem:[#allocation0]]
  $region26: #{tpu_custom_call.1} parent=0
    _
  %s5 = ssub.s32 1, %s3
  %s6 = scalar_select 0, %s5, %s3
  $region1: #{tpu_custom_call.1} parent=0
    #allocation2 [shape = 'u8[24576]{0}', space=vmem, size = 0x6000, scoped, tag = 'input window, operand 0, single buffered']
    #allocation3 [shape = 's32[1]{0}', space=sflag, size = 0x4, scoped, tag = 'scoped memory for tpu_custom_call.1']
    #allocation4 [shape = 'u8[12288]{0}', space=vmem, size = 0x3000, scoped, tag = 'input window, operand 1, single buffered']
    #allocation5 [shape = 's32[1]{0}', space=sflag, size = 0x4, scoped, tag = 'scoped memory for tpu_custom_call.1']
    %7 = vsyncpa [#allocation3], 0
    %8 = vsyncpa [#allocation5], 0
    // Predicated region
    $region2: #{tpu_custom_call.1} parent=1 // pred_check
      _
    $region3: #{tpu_custom_call.1} parent=1 // pred_check_branch
      %10 = sbr.rel (0) target = $region5
    $region4: #{tpu_custom_call.1} parent=1 // pred_region
      %12 = vsyncadd [#allocation3], 0
      %s13 = sshll.u32 %s0, 4
      %s14 = int_to_ptr.hbm [resolvable:$true] %s13
      %s15 = sshll.u32 [#allocation2], 4
      %s16 = int_to_ptr.vmem [resolvable:$true] %s15
      %21 = dma.hbm_to_vmem [thread:$0]  %s14, 768, %s16, [#allocation3], 384, 384, 24
    $region5: #{tpu_custom_call.1} parent=1 // pred_fallthru
      _
    // Predicated region
    $region6: #{tpu_custom_call.1} parent=1 // pred_check
      _
    $region7: #{tpu_custom_call.1} parent=1 // pred_check_branch
      %23 = sbr.rel (0) target = $region9
    $region8: #{tpu_custom_call.1} parent=1 // pred_region
      %25 = vsyncadd [#allocation5], 0
      %s27 = sshll.u32 %s1, 4
      %s28 = int_to_ptr.hbm [resolvable:$true] %s27
      %s29 = sshll.u32 [#allocation4], 4
      %s30 = int_to_ptr.vmem [resolvable:$true] %s29
      %32 = dma.hbm_to_vmem [thread:$0]  %s28, 384, %s30, [#allocation5]
    $region9: #{tpu_custom_call.1} parent=1 // pred_fallthru
      _
    // Predicated region
    $region10: #{tpu_custom_call.1} parent=1 // pred_check
      _
    $region11: #{tpu_custom_call.1} parent=1 // pred_check_branch
      %34 = sbr.rel (0) target = $region13
    $region12: #{tpu_custom_call.1} parent=1 // pred_region
      %36 = dma.done [#allocation3], 768
    $region13: #{tpu_custom_call.1} parent=1 // pred_fallthru
      _
    // Predicated region
    $region14: #{tpu_custom_call.1} parent=1 // pred_check
      _
    $region15: #{tpu_custom_call.1} parent=1 // pred_check_branch
      %38 = sbr.rel (0) target = $region17
    $region16: #{tpu_custom_call.1} parent=1 // pred_region
      %40 = dma.done [#allocation5], 384
    $region17: #{tpu_custom_call.1} parent=1 // pred_fallthru
      _
    %v41 = vld [vmem:[#allocation2] sm:$0xff]
    %v42 = vld [vmem:[#allocation2 + $0x8] sm:$0xff]
    %v43 = vld [vmem:[#allocation2 + $0x10] sm:$0xff]
    %v44 = vld [vmem:[#allocation2 + $0x18] sm:$0xff]
    %v45 = vld [vmem:[#allocation2 + $0x20] sm:$0xff]
    %v46 = vld [vmem:[#allocation2 + $0x28] sm:$0xff]
    %v47 = vunpack.c.l.bf16 %v41
    %v48 = vunpack.c.h.bf16 %v41
    %v49 = vunpack.c.l.bf16 %v42
    %v50 = vunpack.c.h.bf16 %v42
    %v51 = vunpack.c.l.bf16 %v43
    %v52 = vunpack.c.h.bf16 %v43
    %v53 = vunpack.c.l.bf16 %v44
    %v54 = vunpack.c.h.bf16 %v44
    %v55 = vunpack.c.l.bf16 %v45
    %v56 = vunpack.c.h.bf16 %v45
    %v57 = vunpack.c.l.bf16 %v46
    %v58 = vunpack.c.h.bf16 %v46
    %v59 = vrot.slane %v47, 4
    %v60 = vadd.f32 %v47, %v59
    %v61 = vrot.slane %v60, 2
    %v62 = vadd.f32 %v60, %v61
    %v63 = vrot.slane %v62, 1
    %v64 = vadd.f32 %v62, %v63
    %v65 = vrot.slane %v48, 4
    %v66 = vadd.f32 %v48, %v65
    %v67 = vrot.slane %v66, 2
    %v68 = vadd.f32 %v66, %v67
    %v69 = vrot.slane %v68, 1
    %v70 = vadd.f32 %v68, %v69
    %v71 = vrot.slane %v49, 4
    %v72 = vadd.f32 %v49, %v71
    %v73 = vrot.slane %v72, 2
    %v74 = vadd.f32 %v72, %v73
    %v75 = vrot.slane %v74, 1
    %v76 = vadd.f32 %v74, %v75
    %v77 = vrot.slane %v50, 4
    %v78 = vadd.f32 %v50, %v77
    %v79 = vrot.slane %v78, 2
    %v80 = vadd.f32 %v78, %v79
    %v81 = vrot.slane %v80, 1
    %v82 = vadd.f32 %v80, %v81
    %v83 = vrot.slane %v51, 4
    %v84 = vadd.f32 %v51, %v83
    %v85 = vrot.slane %v84, 2
    %v86 = vadd.f32 %v84, %v85
    %v87 = vrot.slane %v86, 1
    %v88 = vadd.f32 %v86, %v87
    %v89 = vrot.slane %v52, 4
    %v90 = vadd.f32 %v52, %v89
    %v91 = vrot.slane %v90, 2
    %v92 = vadd.f32 %v90, %v91
    %v93 = vrot.slane %v92, 1
    %v94 = vadd.f32 %v92, %v93
    %v95 = vrot.slane %v53, 4
    %v96 = vadd.f32 %v53, %v95
    %v97 = vrot.slane %v96, 2
    %v98 = vadd.f32 %v96, %v97
    %v99 = vrot.slane %v98, 1
    %v100 = vadd.f32 %v98, %v99
    %v101 = vrot.slane %v54, 4
    %v102 = vadd.f32 %v54, %v101
    %v103 = vrot.slane %v102, 2
    %v104 = vadd.f32 %v102, %v103
    %v105 = vrot.slane %v104, 1
    %v106 = vadd.f32 %v104, %v105
    %v107 = vrot.slane %v55, 4
    %v108 = vadd.f32 %v55, %v107
    %v109 = vrot.slane %v108, 2
    %v110 = vadd.f32 %v108, %v109
    %v111 = vrot.slane %v110, 1
    %v112 = vadd.f32 %v110, %v111
    %v113 = vrot.slane %v56, 4
    %v114 = vadd.f32 %v56, %v113
    %v115 = vrot.slane %v114, 2
    %v116 = vadd.f32 %v114, %v115
    %v117 = vrot.slane %v116, 1
    %v118 = vadd.f32 %v116, %v117
    %v119 = vrot.slane %v57, 4
    %v120 = vadd.f32 %v57, %v119
    %v121 = vrot.slane %v120, 2
    %v122 = vadd.f32 %v120, %v121
    %v123 = vrot.slane %v122, 1
    %v124 = vadd.f32 %v122, %v123
    %v125 = vrot.slane %v58, 4
    %v126 = vadd.f32 %v58, %v125
    %v127 = vrot.slane %v126, 2
    %v128 = vadd.f32 %v126, %v127
    %v129 = vrot.slane %v128, 1
    %v130 = vadd.f32 %v128, %v129
    %v131 = vld [vmem:[#allocation4] sm:$0xff]
    %v132 = vld [vmem:[#allocation4 + $0x8] sm:$0xff]
    %v133 = vld [vmem:[#allocation4 + $0x10] sm:$0xff]
    %v134 = vmul.f32 %v64, %v64
    %v135 = vmul.f32 %v70, %v70
    %v136 = vmul.f32 %v76, %v76
    %v137 = vmul.f32 %v82, %v82
    %v138 = vmul.f32 %v88, %v88
    %v139 = vmul.f32 %v94, %v94
    %v140 = vmul.f32 %v100, %v100
    %v141 = vmul.f32 %v106, %v106
    %v142 = vmul.f32 %v112, %v112
    %v143 = vmul.f32 %v118, %v118
    %v144 = vmul.f32 %v124, %v124
    %v145 = vmul.f32 %v130, %v130
    %vm158 = vcmask 1041409
    %v159 = vsel %vm158, %v140, %v134
    %v160 = vsel %vm158, %v141, %v135
    %v161 = vsel %vm158, %v142, %v136
    %v162 = vsel %vm158, %v143, %v137
    %v163 = vsel %vm158, %v144, %v138
    %v164 = vsel %vm158, %v145, %v139
    %vm171 = vcmask 1041408
    %v172 = vsel %vm171, %v159, 0.0
    %v173 = vsel %vm171, %v160, 0.0
    %v174 = vadd.f32 %v172, %v173
    %v175 = vsel %vm171, %v161, 0.0
    %v176 = vadd.f32 %v174, %v175
    %v177 = vsel %vm171, %v162, 0.0
    %v178 = vadd.f32 %v176, %v177
    %v179 = vsel %vm171, %v163, 0.0
    %v180 = vadd.f32 %v178, %v179
    %v181 = vsel %vm171, %v164, 0.0
    %v182 = vadd.f32 %v180, %v181
    %183 = vadd.xlane.f32.xlu0 %v182
    %v184 = vpop.xlane.xlu0 %183
    %v185 = vmax.f32 %v184, 1e-24
    %v186 = vrsqrt.pop %v185
    %v187 = vmul.f32 %v186, %v185
    %v188 = vmul.f32 %v187, %v186
    %v189 = vmul.f32 0.5, %v188
    %v190 = vsub.f32 1.5, %v189
    %v191 = vmul.f32 %v186, %v190
    %vm192 = vweird.f32 %v185
    %vm193 = vweird.f32 %v186
    %vm194 = vmor %vm192, %vm193
    %v195 = vsel %vm194, %v186, %v191
    %v197 = vrot.slane %v195, 1
    %v200 = vmul.f32 %v64, %v195
    %v201 = vmul.f32 %v70, %v195
    %v202 = vmul.f32 %v76, %v195
    %v203 = vmul.f32 %v82, %v195
    %v204 = vmul.f32 %v88, %v195
    %v205 = vmul.f32 %v94, %v195
    %v206 = vmul.f32 %v100, %v197
    %v207 = vmul.f32 %v106, %v197
    %v208 = vmul.f32 %v112, %v197
    %v209 = vmul.f32 %v118, %v197
    %v210 = vmul.f32 %v124, %v197
    %v211 = vmul.f32 %v130, %v197
    %v215 = vperm.slane %v131, 0
    %v216 = vperm.slane %v131, 4
    %v217 = vperm.slane %v132, 0
    %v218 = vperm.slane %v132, 4
    %v219 = vperm.slane %v133, 0
    %v220 = vperm.slane %v133, 4
    %v227 = vperm.slane %v215, 0
    %v228 = vperm.slane %v216, 0
    %v229 = vperm.slane %v217, 0
    %v230 = vperm.slane %v218, 0
    %v231 = vperm.slane %v219, 0
    %v232 = vperm.slane %v220, 0
    %v233 = vmul.f32 %v200, %v227
    %v234 = vmul.f32 %v201, %v228
    %v235 = vmul.f32 %v202, %v229
    %v236 = vmul.f32 %v203, %v230
    %v237 = vmul.f32 %v204, %v231
    %v238 = vmul.f32 %v205, %v232
    %v239 = vmul.f32 %v206, %v227
    %v240 = vmul.f32 %v207, %v228
    %v241 = vmul.f32 %v208, %v229
    %v242 = vmul.f32 %v209, %v230
    %v243 = vmul.f32 %v210, %v231
    %v244 = vmul.f32 %v211, %v232
    %v245 = vperm.slane %v131, 1
    %v246 = vperm.slane %v131, 5
    %v247 = vperm.slane %v132, 1
    %v248 = vperm.slane %v132, 5
    %v249 = vperm.slane %v133, 1
    %v250 = vperm.slane %v133, 5
    %v257 = vperm.slane %v245, 1
    %v258 = vperm.slane %v246, 1
    %v259 = vperm.slane %v247, 1
    %v260 = vperm.slane %v248, 1
    %v261 = vperm.slane %v249, 1
    %v262 = vperm.slane %v250, 1
    %v263 = vadd.f32 %v233, %v257
    %v264 = vadd.f32 %v234, %v258
    %v265 = vadd.f32 %v235, %v259
    %v266 = vadd.f32 %v236, %v260
    %v267 = vadd.f32 %v237, %v261
    %v268 = vadd.f32 %v238, %v262
    %v269 = vadd.f32 %v239, %v257
    %v270 = vadd.f32 %v240, %v258
    %v271 = vadd.f32 %v241, %v259
    %v272 = vadd.f32 %v242, %v260
    %v273 = vadd.f32 %v243, %v261
    %v274 = vadd.f32 %v244, %v262
    %v275 = vmax.f32 %v263, 0.0
    %v276 = vmax.f32 %v264, 0.0
    %v277 = vmax.f32 %v265, 0.0
    %v278 = vmax.f32 %v266, 0.0
    %v279 = vmax.f32 %v267, 0.0
    %v280 = vmax.f32 %v268, 0.0
    %v281 = vmax.f32 %v269, 0.0
    %v282 = vmax.f32 %v270, 0.0
    %v283 = vmax.f32 %v271, 0.0
    %v284 = vmax.f32 %v272, 0.0
    %v285 = vmax.f32 %v273, 0.0
    %v286 = vmax.f32 %v274, 0.0
    %v287 = vperm.slane %v131, 2
    %v288 = vperm.slane %v131, 6
    %v289 = vperm.slane %v132, 2
    %v290 = vperm.slane %v132, 6
    %v291 = vperm.slane %v133, 2
    %v292 = vperm.slane %v133, 6
    %v299 = vperm.slane %v287, 2
    %v300 = vperm.slane %v288, 2
    %v301 = vperm.slane %v289, 2
    %v302 = vperm.slane %v290, 2
    %v303 = vperm.slane %v291, 2
    %v304 = vperm.slane %v292, 2
    %v305 = vmul.f32 %v275, %v299
    %v306 = vmul.f32 %v276, %v300
    %v307 = vmul.f32 %v277, %v301
    %v308 = vmul.f32 %v278, %v302
    %v309 = vmul.f32 %v279, %v303
    %v310 = vmul.f32 %v280, %v304
    %v311 = vmul.f32 %v281, %v299
    %v312 = vmul.f32 %v282, %v300
    %v313 = vmul.f32 %v283, %v301
    %v314 = vmul.f32 %v284, %v302
    %v315 = vmul.f32 %v285, %v303
    %v316 = vmul.f32 %v286, %v304
    %v329 = vrot.slane %v311, 7
    %v330 = vsel %vm158, %v329, %v305
    %v331 = vrot.slane %v312, 7
    %v332 = vsel %vm158, %v331, %v306
    %v333 = vrot.slane %v313, 7
    %v334 = vsel %vm158, %v333, %v307
    %v335 = vrot.slane %v314, 7
    %v336 = vsel %vm158, %v335, %v308
    %v337 = vrot.slane %v315, 7
    %v338 = vsel %vm158, %v337, %v309
    %v339 = vrot.slane %v316, 7
    %v340 = vsel %vm158, %v339, %v310
    %v347 = vsel %vm171, %v330, 0.0
    %v348 = vsel %vm171, %v332, 0.0
    %v349 = vadd.f32 %v347, %v348
    %v350 = vsel %vm171, %v334, 0.0
    %v351 = vadd.f32 %v349, %v350
    %v352 = vsel %vm171, %v336, 0.0
    %v353 = vadd.f32 %v351, %v352
    %v354 = vsel %vm171, %v338, 0.0
    %v355 = vadd.f32 %v353, %v354
    %v356 = vsel %vm171, %v340, 0.0
    %v357 = vadd.f32 %v355, %v356
    %358 = vadd.xlane.f32.xlu0 %v357
    %v359 = vpop.xlane.xlu0 %358
    %v360 = vperm.slane %v131, 3
    %v361 = vadd.f32 %v359, %v360
    %vm362 = vcmask 1024
    %363 = vst.msk [vmem:[%s2] sm:$0x3] %vm362, %v361
    // Predicated region
    $region18: #{tpu_custom_call.1} parent=1 // pred_check
      _
    $region19: #{tpu_custom_call.1} parent=1 // pred_check_branch
      %365 = sbr.rel (0) target = $region21
    $region20: #{tpu_custom_call.1} parent=1 // pred_region
      _
    $region21: #{tpu_custom_call.1} parent=1 // pred_fallthru
      _
    // Predicated region
    $region22: #{tpu_custom_call.1} parent=1 // pred_check
      _
    $region23: #{tpu_custom_call.1} parent=1 // pred_check_branch
      %367 = sbr.rel (0) target = $region25
    $region24: #{tpu_custom_call.1} parent=1 // pred_region
      _
    $region25: #{tpu_custom_call.1} parent=1 // pred_fallthru
      _
    %368 = vsyncpa [#allocation3], 1
    %369 = vsyncpa [#allocation5], 1

</llo_original>
